<compile_context>
chip_gen: v5e
topology: v5e:2x2
jax: 0.10.0
libtpu: 0.0.40
codegen_flags: <defaults>
</compile_context>

<pallas_src>
import math
import jax
import jax.numpy as jnp
from jax import lax
from jax.experimental import pallas as pl
from jax.experimental.pallas import tpu as pltpu

# ----------------- small config consistent with the module -----------------
BATCH = 2
SEQ = 8              # max_sequence_len == klen == qlen
EMB = 32             # embedding_dim == n_heads * head_size
NHEAD = 4
DHEAD = EMB // NHEAD
NBASIS = 16          # attn_num_basis (even -> no adjustment branch in __init__)
NUM_TYPES = 3
NUM_CODES = 10
SIGMA0 = 1.0
MU0 = 0.0
RIDGE = 1.0
INV_SQRT_2PI = 1.0 / math.sqrt(2.0 * math.pi)

BS = BATCH * SEQ         # 16: stacked (batch, time) rows
BN = BATCH * NBASIS      # 32: stacked (batch, basis) rows

assert BATCH == 2, "ContinuousSoftmax q=0 row selection below hard-codes BATCH == 2"

# ----------------- lane-dense parameter slab layout: (64, 128) f32 -----------------
SLAB_ROWS = 64
SLAB_COLS = 128
# row block A (rows 0..31)
ROW_A = 0
COL_W0 = 0            # (EMB, EMB)   conv tap t-1, transposed
COL_W1 = 32           # (EMB, EMB)   conv tap t
COL_W2 = 64           # (EMB, EMB)   conv tap t+1
COL_CMS = 96          # (2*BS, BN)   wmu / wsig expansion selectors
# row block B (rows 32..63)
ROW_B = 32
COL_WKV = 0           # (EMB, EMB+NHEAD)  [proj_key.weight^T | proj_value^T @ attn_out per head]
COL_HI = 40           # (EMB, NHEAD)      scaled per-head indicator (1/sqrt(DHEAD) folded)
COL_GBLK = 48         # (BN, BS)          block-diag(G^T) over batch
COL_PSI = 64          # (BN, 2)           [psi_mu, psi_sigma^2] tiled over batch
COL_BCONV = 96        # (1, EMB)          conv bias (row ROW_B only)


def _sigmoid(x):
    # numerically stable logistic; single reciprocal + select (no second divide)
    e = jnp.exp(-jnp.abs(x))
    r = 1.0 / (1.0 + e)
    return jnp.where(x >= 0, r, 1.0 - r)


def _softplus(x):
    # matches torch.nn.Softplus(beta=1, threshold=20)
    return jnp.where(x > 20.0, x, jnp.log(1.0 + jnp.exp(jnp.minimum(x, 20.0))))


# ----------------------------- Pallas kernel --------------------------------
def informer_kernel(x_ref, p_ref, o_ref):
    f32 = jnp.float32
    x = x_ref[...]                                                     # (BS, EMB) time-major rows

    # ---- Conv1d(EMB, EMB, k=3, pad=1) mask net: XLU rolls + boundary masks + 3 independent dots
    tpos = lax.broadcasted_iota(jnp.int32, (BS, EMB), 0) & (SEQ - 1)   # time index within batch
    xm1 = jnp.where(tpos == 0, 0.0, pltpu.roll(x, shift=1, axis=0))        # x[t-1] (zero at t=0)
    xp1 = jnp.where(tpos == SEQ - 1, 0.0, pltpu.roll(x, shift=BS - 1, axis=0))  # x[t+1] (zero at t=SEQ-1)

    conv = jnp.dot(xm1, p_ref[ROW_A:ROW_A + EMB, COL_W0:COL_W0 + EMB],
                   preferred_element_type=f32)
    conv = conv + jnp.dot(x, p_ref[ROW_A:ROW_A + EMB, COL_W1:COL_W1 + EMB],
                          preferred_element_type=f32)
    conv = conv + jnp.dot(xp1, p_ref[ROW_A:ROW_A + EMB, COL_W2:COL_W2 + EMB],
                          preferred_element_type=f32)
    conv = conv + p_ref[ROW_B:ROW_B + 1, COL_BCONV:COL_BCONV + EMB]    # (1, EMB) bias broadcast
    xk = x * _sigmoid(conv)                                            # masked keys (BS, EMB)

    # ---- B = value_function(xk): rows = b*NBASIS + n
    bst = jnp.dot(p_ref[ROW_B:ROW_B + BN, COL_GBLK:COL_GBLK + BS], xk,
                  preferred_element_type=f32)                          # (BN, EMB)

    # ---- keys and (proj_value @ attn_out)-per-head in ONE fused dot
    bkv = jnp.dot(bst, p_ref[ROW_B:ROW_B + EMB, COL_WKV:COL_WKV + EMB + NHEAD],
                  preferred_element_type=f32)                          # (BN, EMB + NHEAD)
    bk = bkv[:, 0:EMB]                                                 # keys[b, n, :]
    vw = bkv[:, EMB:EMB + NHEAD]                                       # values[b,n,:] . wout | head

    # ---- mu / sigma logits for every (b, q, h); keys never materialized per head:
    #      msk = cms @ keys  (associativity of cms @ (B @ wkT));  theta = (x * msk) @ hi
    msk = jnp.dot(p_ref[ROW_A:ROW_A + 2 * BS, COL_CMS:COL_CMS + BN], bk,
                  preferred_element_type=f32)                          # (2*BS, EMB): [wmu.K ; wsig.K]
    hi = p_ref[ROW_B:ROW_B + EMB, COL_HI:COL_HI + NHEAD]               # scaled head indicator
    theta_mu = jnp.dot(x * msk[0:BS, :], hi, preferred_element_type=f32)        # (BS, NHEAD)
    theta_sig = jnp.dot(x * msk[BS:2 * BS, :], hi, preferred_element_type=f32)  # (BS, NHEAD)

    mu_all = _sigmoid(theta_mu)                                        # (BS, NHEAD)
    sig_all = jnp.maximum(_softplus(theta_sig), 1e-6)                  # clamped sigma_sq

    # ---- KL regularizer, reduced in-kernel to a scalar (mean over BATCH*NHEAD*SEQ)
    inv_s0sq = 1.0 / (SIGMA0 * SIGMA0)
    ratio = sig_all * inv_s0sq
    kl = 0.5 * (ratio - jnp.log(ratio) - 1.0 + (mu_all - MU0) ** 2 * inv_s0sq)
    kl_mean = jnp.sum(kl, keepdims=True) * (1.0 / (BATCH * NHEAD * SEQ))        # (1,1)

    # ---- ContinuousSoftmax attention at q = 0 only (only query row 0 feeds predictions)
    row_n = lax.broadcasted_iota(jnp.int32, (BN, NHEAD), 0)
    is_b0 = row_n < NBASIS                                             # hard-codes BATCH == 2
    mu0 = jnp.where(is_b0, mu_all[0:1, :], mu_all[SEQ:SEQ + 1, :])     # (BN, NHEAD)
    sig0 = jnp.where(is_b0, sig_all[0:1, :], sig_all[SEQ:SEQ + 1, :])  # (BN, NHEAD)
    psi_mu_c = p_ref[ROW_B:ROW_B + BN, COL_PSI:COL_PSI + 1]            # (BN, 1)
    psi_s2_c = p_ref[ROW_B:ROW_B + BN, COL_PSI + 1:COL_PSI + 2]        # (BN, 1)
    inv_s = lax.rsqrt(psi_s2_c + sig0)                                 # EUP rsqrt, no divides
    tt = (mu0 - psi_mu_c) * inv_s
    r_arr = INV_SQRT_2PI * jnp.exp(-0.5 * tt * tt) * inv_s             # r[b*NBASIS+n, h]

    # ---- context + attn_out folded: pred_b = sum_{h,n} r[b,h,n] * vw[b*NBASIS+n, h]
    pmat = r_arr * vw
    pred0 = jnp.sum(pmat[0:NBASIS, :], keepdims=True)                  # (1,1)
    pred1 = jnp.sum(pmat[NBASIS:2 * NBASIS, :], keepdims=True)         # (1,1)

    # ---- single lane-dense (8,128) output tile: row 0 = [pred_b0, pred_b1, kl_mean, 0, ...]
    ri = lax.broadcasted_iota(jnp.int32, (8, 128), 0)
    ci = lax.broadcasted_iota(jnp.int32, (8, 128), 1)
    out = jnp.where((ri == 0) & (ci == 0), pred0, 0.0)
    out = jnp.where((ri == 0) & (ci == 1), pred1, out)
    out = jnp.where((ri == 0) & (ci == 2), kl_mean, out)
    o_ref[...] = out


# ------------------------------- wrapper -------------------------------------
def run_informer_kernel(x_flat, param_slab):
    out = pl.pallas_call(
        informer_kernel,
        out_shape=jax.ShapeDtypeStruct((8, 128), jnp.float32),
        in_specs=[
            pl.BlockSpec(memory_space=pltpu.MemorySpace.VMEM),   # x: full array, no grid
            pl.BlockSpec(memory_space=pltpu.MemorySpace.VMEM),   # packed parameter slab
        ],
        out_specs=pl.BlockSpec(memory_space=pltpu.MemorySpace.VMEM),
    )(x_flat, param_slab)
    predictions = out[0, 0:BATCH].reshape(BATCH, 1)
    kl_loss = out[0, BATCH]
    return predictions, kl_loss


# ------------------- host-side constant folding into one lane-dense slab ----------------
def build_param_slab(params, G, psi_mu, psi_sigma):
    f32 = jnp.float32
    scale = 1.0 / math.sqrt(DHEAD)
    eye_b = jnp.eye(BATCH, dtype=f32)

    slab = jnp.zeros((SLAB_ROWS, SLAB_COLS), f32)

    def put(s, row, col, mat):
        mat = jnp.asarray(mat, f32)
        r, c = mat.shape
        return s.at[row:row + r, col:col + c].set(mat)

    # conv taps, transposed to (in, out)
    W = params["wconv"]                                                # (tap, out, in)
    slab = put(slab, ROW_A, COL_W0, W[0].T)
    slab = put(slab, ROW_A, COL_W1, W[1].T)
    slab = put(slab, ROW_A, COL_W2, W[2].T)

    # wmu / wsig expansion selectors (block-diag over batch), stacked on rows
    ones_q = jnp.ones((SEQ, 1), f32)
    cms = jnp.concatenate(
        [jnp.kron(eye_b, ones_q * params["wmu"][None, :]),
         jnp.kron(eye_b, ones_q * params["wsig"][None, :])], axis=0)   # (2*BS, BN)
    slab = put(slab, ROW_A, COL_CMS, cms)

    # fused [proj_key^T | proj_value^T @ (attn_out per head)]
    head_ind = jnp.kron(jnp.eye(NHEAD, dtype=f32), jnp.ones((DHEAD, 1), f32))   # (EMB, NHEAD)
    woh = head_ind * params["wout"][:, None]
    wvo = params["wvT"] @ woh                                          # (EMB, NHEAD)
    wfused = jnp.concatenate([params["wkT"], wvo], axis=1)             # (EMB, EMB+NHEAD)
    slab = put(slab, ROW_B, COL_WKV, wfused)

    # scaled per-head indicator (1/sqrt(DHEAD) folded)
    slab = put(slab, ROW_B, COL_HI, scale * head_ind)

    # block-diag(G^T) over batch
    slab = put(slab, ROW_B, COL_GBLK, jnp.kron(eye_b, G.T))            # (BN, BS)

    # [psi_mu, psi_sigma^2] tiled over batch
    psi_cols = jnp.stack(
        [jnp.concatenate([psi_mu] * BATCH),
         jnp.concatenate([psi_sigma ** 2] * BATCH)], axis=1)           # (BN, 2)
    slab = put(slab, ROW_B, COL_PSI, psi_cols)

    # conv bias row
    slab = put(slab, ROW_B, COL_BCONV, params["bconv"].reshape(1, EMB))
    return slab


# ------------------- setup: basis functions, G matrix, params ----------------
def _phi_std(t):
    return INV_SQRT_2PI * jnp.exp(-0.5 * t * t)


def make_basis():
    mu_lin = jnp.linspace(0.0, 1.0, NBASIS // 2)
    sigmas = jnp.array([0.01, 0.05], jnp.float32)
    psi_mu = jnp.repeat(mu_lin, 2).astype(jnp.float32)      # meshgrid('ij').flatten()
    psi_sigma = jnp.tile(sigmas, NBASIS // 2).astype(jnp.float32)
    return psi_mu, psi_sigma


def compute_G(psi_mu, psi_sigma, length):
    positions = jnp.arange(1, length + 1, dtype=jnp.float32) / length
    t = positions[:, None]
    Fm = (_phi_std((t - psi_mu[None, :]) / psi_sigma[None, :]) / psi_sigma[None, :]).T   # (NBASIS, SEQ)
    G = Fm.T @ jnp.linalg.inv(Fm @ Fm.T + RIDGE * jnp.eye(NBASIS, dtype=jnp.float32))
    return G.astype(jnp.float32)                                                          # (SEQ, NBASIS)


def init_params(key):
    ks = jax.random.split(key, 9)
    s = 0.1
    return {
        "emb_code": s * jax.random.normal(ks[0], (NUM_CODES, EMB), jnp.float32),
        "emb_type": s * jax.random.normal(ks[1], (NUM_TYPES, EMB), jnp.float32),
        "wconv": s * jax.random.normal(ks[2], (3, EMB, EMB), jnp.float32),   # (tap, out, in)
        "bconv": s * jax.random.normal(ks[3], (EMB,), jnp.float32),
        "wkT": s * jax.random.normal(ks[4], (EMB, EMB), jnp.float32),        # proj_key.weight^T
        "wvT": s * jax.random.normal(ks[5], (EMB, EMB), jnp.float32),        # proj_value.weight^T
        "wmu": s * jax.random.normal(ks[6], (NBASIS,), jnp.float32),
        "wsig": s * jax.random.normal(ks[7], (NBASIS,), jnp.float32),
        "wout": s * jax.random.normal(ks[8], (EMB,), jnp.float32),           # attn_out.weight (d_model=1)
    }


# ------------------------- pure-JAX reference (checking) ---------------------
def reference(params, emb, G, psi_mu, psi_sigma):
    def sigmoid(v):
        return jax.nn.sigmoid(v)

    x = jnp.transpose(emb, (0, 2, 1))                                  # (B, EMB, SEQ) channel-major
    xm1 = jnp.pad(x, ((0, 0), (0, 0), (1, 0)))[:, :, :SEQ]
    xp1 = jnp.pad(x, ((0, 0), (0, 0), (0, 1)))[:, :, 1:]
    W = params["wconv"]
    conv = (jnp.einsum("oi,bit->bot", W[0], xm1)
            + jnp.einsum("oi,bit->bot", W[1], x)
            + jnp.einsum("oi,bit->bot", W[2], xp1)
            + params["bconv"][None, :, None])
    xk = x * sigmoid(conv)
    B = jnp.einsum("bdt,tn->bnd", xk, G)                               # (B, NBASIS, EMB)
    keys = B @ params["wkT"]
    values = B @ params["wvT"]
    qh = emb.reshape(BATCH, SEQ, NHEAD, DHEAD).transpose(0, 2, 1, 3)
    kh = keys.reshape(BATCH, NBASIS, NHEAD, DHEAD).transpose(0, 2, 1, 3)
    vh = values.reshape(BATCH, NBASIS, NHEAD, DHEAD).transpose(0, 2, 1, 3)
    scores = jnp.einsum("bhqd,bhnd->bhqn", qh / math.sqrt(DHEAD), kh)
    mu = sigmoid(jnp.einsum("bhqn,n->bhq", scores, params["wmu"]))[..., None]
    sig = jnp.maximum(jax.nn.softplus(jnp.einsum("bhqn,n->bhq", scores, params["wsig"]))[..., None], 1e-6)
    kl = 0.5 * (sig / SIGMA0 ** 2 - jnp.log(sig / SIGMA0 ** 2) - 1.0
                + (mu - MU0) ** 2 / SIGMA0 ** 2)
    s_comb = jnp.sqrt(psi_sigma[None, None, None, :] ** 2 + sig)
    t = (mu - psi_mu[None, None, None, :]) / s_comb
    r = INV_SQRT_2PI * jnp.exp(-0.5 * t * t) / s_comb
    ctx = jnp.einsum("bhqn,bhnd->bhqd", r, vh)
    ctx = ctx.transpose(0, 2, 1, 3).reshape(BATCH, SEQ, EMB)
    out = jnp.einsum("bqd,d->bq", ctx, params["wout"])
    return out[:, 0:1], kl.mean()


# ----------------------------------- main ------------------------------------
if __name__ == "__main__":
    key = jax.random.PRNGKey(0)
    kp, kc, kt = jax.random.split(key, 3)
    params = init_params(kp)
    codes = jax.random.randint(kc, (BATCH, SEQ), 0, NUM_CODES)
    types = jax.random.randint(kt, (BATCH, SEQ), 0, NUM_TYPES)

    psi_mu, psi_sigma = make_basis()
    G = compute_G(psi_mu, psi_sigma, SEQ)

    # BaselineProjector stand-in (plain JAX glue): (B, SEQ, EMB); k == q == embeddings
    emb = (params["emb_code"][codes] + params["emb_type"][types]).astype(jnp.float32)

    x_flat = emb.reshape(BS, EMB)                 # time-major stacked rows (b*SEQ + t, EMB)
    param_slab = build_param_slab(params, G, psi_mu, psi_sigma)

    predictions, kl_loss = run_informer_kernel(x_flat, param_slab)
    jax.block_until_ready((predictions, kl_loss))

    pred_ref, kl_ref = reference(params, emb, G, psi_mu, psi_sigma)
    assert predictions.shape == (BATCH, 1)
    assert jnp.allclose(predictions, pred_ref, atol=2e-3, rtol=2e-3), "predictions mismatch"
    assert jnp.allclose(kl_loss, kl_ref, atol=2e-3, rtol=2e-3), "kl_loss mismatch"
    print("KERNEL_OK")
</pallas_src>

<mosaic_0001>
module attributes {stable_mosaic.version = 11 : i64} {
  func.func @informer_kernel(%arg0: memref<16x32xf32, #tpu.memory_space<vmem>>, %arg1: memref<64x128xf32, #tpu.memory_space<vmem>>, %arg2: memref<8x128xf32, #tpu.memory_space<vmem>>) attributes {dimension_semantics = [], scalar_prefetch = 0 : i64, scratch_operands = 0 : i64, tpu.core_type = #tpu.core_type<tc>} {
    %c0 = arith.constant 0 : index
    %c0_0 = arith.constant 0 : index
    %0 = vector.load %arg0[%c0, %c0_0] : memref<16x32xf32, #tpu.memory_space<vmem>>, vector<16x32xf32>
    %1 = tpu.iota {dimensions = array<i32: 0>} : vector<16x32xi32>
    %c7_i32 = arith.constant 7 : i32
    %2 = vector.broadcast %c7_i32 : i32 to vector<16x32xi32>
    %3 = arith.andi %1, %2 : vector<16x32xi32>
    %c0_i32 = arith.constant 0 : i32
    %4 = vector.broadcast %c0_i32 : i32 to vector<16x32xi32>
    %5 = arith.cmpi eq, %3, %4 : vector<16x32xi32>
    %c1_i32 = arith.constant 1 : i32
    %6 = tpu.dynamic_rotate %0 by %c1_i32 dim 0 : vector<16x32xf32>, i32 -> vector<16x32xf32>
    %cst = arith.constant 0.000000e+00 : f32
    %7 = vector.broadcast %cst : f32 to vector<16x32xf32>
    %8 = arith.select %5, %7, %6 : vector<16x32xi1>, vector<16x32xf32>
    %c7_i32_1 = arith.constant 7 : i32
    %9 = vector.broadcast %c7_i32_1 : i32 to vector<16x32xi32>
    %10 = arith.cmpi eq, %3, %9 : vector<16x32xi32>
    %c15_i32 = arith.constant 15 : i32
    %11 = tpu.dynamic_rotate %0 by %c15_i32 dim 0 : vector<16x32xf32>, i32 -> vector<16x32xf32>
    %cst_2 = arith.constant 0.000000e+00 : f32
    %12 = vector.broadcast %cst_2 : f32 to vector<16x32xf32>
    %13 = arith.select %10, %12, %11 : vector<16x32xi1>, vector<16x32xf32>
    %c0_3 = arith.constant 0 : index
    %c0_4 = arith.constant 0 : index
    %14 = vector.load %arg1[%c0_3, %c0_4] : memref<64x128xf32, #tpu.memory_space<vmem>>, vector<32x32xf32>
    %cst_5 = arith.constant dense<0.000000e+00> : vector<16x32xf32>
    %15 = tpu.matmul %8, %14, %cst_5 {dimension_numbers = #tpu.dot_dimension_numbers<[1], [0], [0], [1], [0, 0, 1, 1], [], []>} : vector<16x32xf32>, vector<32x32xf32>, vector<16x32xf32> -> vector<16x32xf32>
    %c0_6 = arith.constant 0 : index
    %c32 = arith.constant 32 : index
    %16 = vector.load %arg1[%c0_6, %c32] : memref<64x128xf32, #tpu.memory_space<vmem>>, vector<32x32xf32>
    %cst_7 = arith.constant dense<0.000000e+00> : vector<16x32xf32>
    %17 = tpu.matmul %0, %16, %cst_7 {dimension_numbers = #tpu.dot_dimension_numbers<[1], [0], [0], [1], [0, 0, 1, 1], [], []>} : vector<16x32xf32>, vector<32x32xf32>, vector<16x32xf32> -> vector<16x32xf32>
    %18 = arith.addf %15, %17 : vector<16x32xf32>
    %c0_8 = arith.constant 0 : index
    %c64 = arith.constant 64 : index
    %19 = vector.load %arg1[%c0_8, %c64] : memref<64x128xf32, #tpu.memory_space<vmem>>, vector<32x32xf32>
    %cst_9 = arith.constant dense<0.000000e+00> : vector<16x32xf32>
    %20 = tpu.matmul %13, %19, %cst_9 {dimension_numbers = #tpu.dot_dimension_numbers<[1], [0], [0], [1], [0, 0, 1, 1], [], []>} : vector<16x32xf32>, vector<32x32xf32>, vector<16x32xf32> -> vector<16x32xf32>
    %21 = arith.addf %18, %20 : vector<16x32xf32>
    %c32_10 = arith.constant 32 : index
    %c96 = arith.constant 96 : index
    %22 = vector.load %arg1[%c32_10, %c96] : memref<64x128xf32, #tpu.memory_space<vmem>>, vector<1x32xf32>
    %23 = vector.broadcast %22 : vector<1x32xf32> to vector<16x32xf32>
    %24 = arith.addf %21, %23 : vector<16x32xf32>
    %25 = math.absf %24 : vector<16x32xf32>
    %cst_11 = arith.constant 0.000000e+00 : f32
    %26 = vector.broadcast %cst_11 : f32 to vector<16x32xf32>
    %27 = arith.subf %26, %25 : vector<16x32xf32>
    %28 = math.exp %27 : vector<16x32xf32>
    %cst_12 = arith.constant 1.000000e+00 : f32
    %29 = vector.broadcast %cst_12 : f32 to vector<16x32xf32>
    %30 = arith.addf %29, %28 : vector<16x32xf32>
    %cst_13 = arith.constant 1.000000e+00 : f32
    %31 = vector.broadcast %cst_13 : f32 to vector<16x32xf32>
    %32 = arith.divf %31, %30 : vector<16x32xf32>
    %cst_14 = arith.constant 0.000000e+00 : f32
    %33 = vector.broadcast %cst_14 : f32 to vector<16x32xf32>
    %34 = arith.cmpf oge, %24, %33 : vector<16x32xf32>
    %cst_15 = arith.constant 1.000000e+00 : f32
    %35 = vector.broadcast %cst_15 : f32 to vector<16x32xf32>
    %36 = arith.subf %35, %32 : vector<16x32xf32>
    %37 = arith.select %34, %32, %36 : vector<16x32xi1>, vector<16x32xf32>
    %38 = arith.mulf %0, %37 : vector<16x32xf32>
    %c32_16 = arith.constant 32 : index
    %c48 = arith.constant 48 : index
    %39 = vector.load %arg1[%c32_16, %c48] : memref<64x128xf32, #tpu.memory_space<vmem>>, vector<32x16xf32>
    %cst_17 = arith.constant dense<0.000000e+00> : vector<32x32xf32>
    %40 = tpu.matmul %39, %38, %cst_17 {dimension_numbers = #tpu.dot_dimension_numbers<[1], [0], [0], [1], [0, 0, 1, 1], [], []>} : vector<32x16xf32>, vector<16x32xf32>, vector<32x32xf32> -> vector<32x32xf32>
    %c32_18 = arith.constant 32 : index
    %c0_19 = arith.constant 0 : index
    %41 = vector.load %arg1[%c32_18, %c0_19] : memref<64x128xf32, #tpu.memory_space<vmem>>, vector<32x36xf32>
    %cst_20 = arith.constant dense<0.000000e+00> : vector<32x36xf32>
    %42 = tpu.matmul %40, %41, %cst_20 {dimension_numbers = #tpu.dot_dimension_numbers<[1], [0], [0], [1], [0, 0, 1, 1], [], []>} : vector<32x32xf32>, vector<32x36xf32>, vector<32x36xf32> -> vector<32x36xf32>
    %43 = vector.extract_strided_slice %42 {offsets = [0, 0], sizes = [32, 32], strides = [1, 1]} : vector<32x36xf32> to vector<32x32xf32>
    %44 = vector.extract_strided_slice %42 {offsets = [0, 32], sizes = [32, 4], strides = [1, 1]} : vector<32x36xf32> to vector<32x4xf32>
    %c0_21 = arith.constant 0 : index
    %c96_22 = arith.constant 96 : index
    %45 = vector.load %arg1[%c0_21, %c96_22] : memref<64x128xf32, #tpu.memory_space<vmem>>, vector<32x32xf32>
    %cst_23 = arith.constant dense<0.000000e+00> : vector<32x32xf32>
    %46 = tpu.matmul %45, %43, %cst_23 {dimension_numbers = #tpu.dot_dimension_numbers<[1], [0], [0], [1], [0, 0, 1, 1], [], []>} : vector<32x32xf32>, vector<32x32xf32>, vector<32x32xf32> -> vector<32x32xf32>
    %c32_24 = arith.constant 32 : index
    %c40 = arith.constant 40 : index
    %47 = vector.load %arg1[%c32_24, %c40] : memref<64x128xf32, #tpu.memory_space<vmem>>, vector<32x4xf32>
    %48 = vector.extract_strided_slice %46 {offsets = [0, 0], sizes = [16, 32], strides = [1, 1]} : vector<32x32xf32> to vector<16x32xf32>
    %49 = arith.mulf %0, %48 : vector<16x32xf32>
    %cst_25 = arith.constant dense<0.000000e+00> : vector<16x4xf32>
    %50 = tpu.matmul %49, %47, %cst_25 {dimension_numbers = #tpu.dot_dimension_numbers<[1], [0], [0], [1], [0, 0, 1, 1], [], []>} : vector<16x32xf32>, vector<32x4xf32>, vector<16x4xf32> -> vector<16x4xf32>
    %51 = vector.extract_strided_slice %46 {offsets = [16, 0], sizes = [16, 32], strides = [1, 1]} : vector<32x32xf32> to vector<16x32xf32>
    %52 = arith.mulf %0, %51 : vector<16x32xf32>
    %cst_26 = arith.constant dense<0.000000e+00> : vector<16x4xf32>
    %53 = tpu.matmul %52, %47, %cst_26 {dimension_numbers = #tpu.dot_dimension_numbers<[1], [0], [0], [1], [0, 0, 1, 1], [], []>} : vector<16x32xf32>, vector<32x4xf32>, vector<16x4xf32> -> vector<16x4xf32>
    %54 = math.absf %50 : vector<16x4xf32>
    %cst_27 = arith.constant 0.000000e+00 : f32
    %55 = vector.broadcast %cst_27 : f32 to vector<16x4xf32>
    %56 = arith.subf %55, %54 : vector<16x4xf32>
    %57 = math.exp %56 : vector<16x4xf32>
    %cst_28 = arith.constant 1.000000e+00 : f32
    %58 = vector.broadcast %cst_28 : f32 to vector<16x4xf32>
    %59 = arith.addf %58, %57 : vector<16x4xf32>
    %cst_29 = arith.constant 1.000000e+00 : f32
    %60 = vector.broadcast %cst_29 : f32 to vector<16x4xf32>
    %61 = arith.divf %60, %59 : vector<16x4xf32>
    %cst_30 = arith.constant 0.000000e+00 : f32
    %62 = vector.broadcast %cst_30 : f32 to vector<16x4xf32>
    %63 = arith.cmpf oge, %50, %62 : vector<16x4xf32>
    %cst_31 = arith.constant 1.000000e+00 : f32
    %64 = vector.broadcast %cst_31 : f32 to vector<16x4xf32>
    %65 = arith.subf %64, %61 : vector<16x4xf32>
    %66 = arith.select %63, %61, %65 : vector<16x4xi1>, vector<16x4xf32>
    %cst_32 = arith.constant 2.000000e+01 : f32
    %67 = vector.broadcast %cst_32 : f32 to vector<16x4xf32>
    %68 = arith.cmpf ogt, %53, %67 : vector<16x4xf32>
    %cst_33 = arith.constant 2.000000e+01 : f32
    %69 = vector.broadcast %cst_33 : f32 to vector<16x4xf32>
    %70 = arith.minimumf %53, %69 : vector<16x4xf32>
    %71 = math.exp %70 : vector<16x4xf32>
    %cst_34 = arith.constant 1.000000e+00 : f32
    %72 = vector.broadcast %cst_34 : f32 to vector<16x4xf32>
    %73 = arith.addf %72, %71 : vector<16x4xf32>
    %74 = math.log %73 : vector<16x4xf32>
    %75 = arith.select %68, %53, %74 : vector<16x4xi1>, vector<16x4xf32>
    %cst_35 = arith.constant 9.99999997E-7 : f32
    %76 = vector.broadcast %cst_35 : f32 to vector<16x4xf32>
    %77 = arith.maximumf %75, %76 : vector<16x4xf32>
    %cst_36 = arith.constant 1.000000e+00 : f32
    %78 = vector.broadcast %cst_36 : f32 to vector<16x4xf32>
    %79 = arith.mulf %77, %78 : vector<16x4xf32>
    %80 = math.log %79 : vector<16x4xf32>
    %81 = arith.subf %79, %80 : vector<16x4xf32>
    %cst_37 = arith.constant 1.000000e+00 : f32
    %82 = vector.broadcast %cst_37 : f32 to vector<16x4xf32>
    %83 = arith.subf %81, %82 : vector<16x4xf32>
    %cst_38 = arith.constant 0.000000e+00 : f32
    %84 = vector.broadcast %cst_38 : f32 to vector<16x4xf32>
    %85 = arith.subf %66, %84 : vector<16x4xf32>
    %86 = arith.mulf %85, %85 : vector<16x4xf32>
    %cst_39 = arith.constant 1.000000e+00 : f32
    %87 = vector.broadcast %cst_39 : f32 to vector<16x4xf32>
    %88 = arith.mulf %86, %87 : vector<16x4xf32>
    %89 = arith.addf %83, %88 : vector<16x4xf32>
    %cst_40 = arith.constant 5.000000e-01 : f32
    %90 = vector.broadcast %cst_40 : f32 to vector<16x4xf32>
    %91 = arith.mulf %90, %89 : vector<16x4xf32>
    %92 = vector.shape_cast %91 : vector<16x4xf32> to vector<1x16x4xf32>
    %cst_41 = arith.constant dense<0.000000e+00> : vector<1xf32>
    %93 = vector.multi_reduction <add>, %92, %cst_41 [1, 2] : vector<1x16x4xf32> to vector<1xf32>
    %94 = vector.shape_cast %93 : vector<1xf32> to vector<1x1x1xf32>
    %95 = vector.extract %94[0, 0, 0] : f32 from vector<1x1x1xf32>
    %96 = vector.broadcast %95 : f32 to vector<1x1xf32>
    %cst_42 = arith.constant 1.562500e-02 : f32
    %97 = vector.broadcast %cst_42 : f32 to vector<1x1xf32>
    %98 = arith.mulf %96, %97 : vector<1x1xf32>
    %99 = tpu.iota {dimensions = array<i32: 0>} : vector<32x4xi32>
    %c16_i32 = arith.constant 16 : i32
    %100 = vector.broadcast %c16_i32 : i32 to vector<32x4xi32>
    %101 = arith.cmpi slt, %99, %100 : vector<32x4xi32>
    %102 = vector.extract_strided_slice %66 {offsets = [0, 0], sizes = [1, 4], strides = [1, 1]} : vector<16x4xf32> to vector<1x4xf32>
    %103 = vector.extract_strided_slice %66 {offsets = [8, 0], sizes = [1, 4], strides = [1, 1]} : vector<16x4xf32> to vector<1x4xf32>
    %104 = vector.shape_cast %102 : vector<1x4xf32> to vector<1x4xf32>
    %105 = vector.broadcast %104 : vector<1x4xf32> to vector<32x4xf32>
    %106 = vector.shape_cast %103 : vector<1x4xf32> to vector<1x4xf32>
    %107 = vector.broadcast %106 : vector<1x4xf32> to vector<32x4xf32>
    %108 = arith.select %101, %105, %107 : vector<32x4xi1>, vector<32x4xf32>
    %109 = vector.extract_strided_slice %77 {offsets = [0, 0], sizes = [1, 4], strides = [1, 1]} : vector<16x4xf32> to vector<1x4xf32>
    %110 = vector.extract_strided_slice %77 {offsets = [8, 0], sizes = [1, 4], strides = [1, 1]} : vector<16x4xf32> to vector<1x4xf32>
    %111 = vector.shape_cast %109 : vector<1x4xf32> to vector<1x4xf32>
    %112 = vector.broadcast %111 : vector<1x4xf32> to vector<32x4xf32>
    %113 = vector.shape_cast %110 : vector<1x4xf32> to vector<1x4xf32>
    %114 = vector.broadcast %113 : vector<1x4xf32> to vector<32x4xf32>
    %115 = arith.select %101, %112, %114 : vector<32x4xi1>, vector<32x4xf32>
    %c32_43 = arith.constant 32 : index
    %c64_44 = arith.constant 64 : index
    %116 = vector.load %arg1[%c32_43, %c64_44] : memref<64x128xf32, #tpu.memory_space<vmem>>, vector<32x1xf32>
    %c32_45 = arith.constant 32 : index
    %c65 = arith.constant 65 : index
    %117 = vector.load %arg1[%c32_45, %c65] : memref<64x128xf32, #tpu.memory_space<vmem>>, vector<32x1xf32>
    %118 = vector.broadcast %117 : vector<32x1xf32> to vector<32x4xf32>
    %119 = arith.addf %118, %115 : vector<32x4xf32>
    %120 = math.rsqrt %119 : vector<32x4xf32>
    %121 = vector.broadcast %116 : vector<32x1xf32> to vector<32x4xf32>
    %122 = arith.subf %108, %121 : vector<32x4xf32>
    %123 = arith.mulf %122, %120 : vector<32x4xf32>
    %cst_46 = arith.constant -5.000000e-01 : f32
    %124 = vector.broadcast %cst_46 : f32 to vector<32x4xf32>
    %125 = arith.mulf %124, %123 : vector<32x4xf32>
    %126 = arith.mulf %125, %123 : vector<32x4xf32>
    %127 = math.exp %126 : vector<32x4xf32>
    %cst_47 = arith.constant 0.398942292 : f32
    %128 = vector.broadcast %cst_47 : f32 to vector<32x4xf32>
    %129 = arith.mulf %128, %127 : vector<32x4xf32>
    %130 = arith.mulf %129, %120 : vector<32x4xf32>
    %131 = arith.mulf %130, %44 : vector<32x4xf32>
    %132 = vector.extract_strided_slice %131 {offsets = [0, 0], sizes = [16, 4], strides = [1, 1]} : vector<32x4xf32> to vector<16x4xf32>
    %133 = vector.shape_cast %132 : vector<16x4xf32> to vector<1x16x4xf32>
    %cst_48 = arith.constant dense<0.000000e+00> : vector<1xf32>
    %134 = vector.multi_reduction <add>, %133, %cst_48 [1, 2] : vector<1x16x4xf32> to vector<1xf32>
    %135 = vector.shape_cast %134 : vector<1xf32> to vector<1x1x1xf32>
    %136 = vector.extract %135[0, 0, 0] : f32 from vector<1x1x1xf32>
    %137 = vector.broadcast %136 : f32 to vector<1x1xf32>
    %138 = vector.extract_strided_slice %131 {offsets = [16, 0], sizes = [16, 4], strides = [1, 1]} : vector<32x4xf32> to vector<16x4xf32>
    %139 = vector.shape_cast %138 : vector<16x4xf32> to vector<1x16x4xf32>
    %cst_49 = arith.constant dense<0.000000e+00> : vector<1xf32>
    %140 = vector.multi_reduction <add>, %139, %cst_49 [1, 2] : vector<1x16x4xf32> to vector<1xf32>
    %141 = vector.shape_cast %140 : vector<1xf32> to vector<1x1x1xf32>
    %142 = vector.extract %141[0, 0, 0] : f32 from vector<1x1x1xf32>
    %143 = vector.broadcast %142 : f32 to vector<1x1xf32>
    %144 = tpu.iota {dimensions = array<i32: 0>} : vector<8x128xi32>
    %145 = tpu.iota {dimensions = array<i32: 1>} : vector<8x128xi32>
    %c0_i32_50 = arith.constant 0 : i32
    %146 = vector.broadcast %c0_i32_50 : i32 to vector<8x128xi32>
    %147 = arith.cmpi eq, %144, %146 : vector<8x128xi32>
    %c0_i32_51 = arith.constant 0 : i32
    %148 = vector.broadcast %c0_i32_51 : i32 to vector<8x128xi32>
    %149 = arith.cmpi eq, %145, %148 : vector<8x128xi32>
    %150 = arith.andi %147, %149 : vector<8x128xi1>
    %cst_52 = arith.constant 0.000000e+00 : f32
    %151 = vector.shape_cast %137 : vector<1x1xf32> to vector<1x1xf32>
    %152 = vector.broadcast %151 : vector<1x1xf32> to vector<8x128xf32>
    %153 = vector.broadcast %cst_52 : f32 to vector<8x128xf32>
    %154 = arith.select %150, %152, %153 : vector<8x128xi1>, vector<8x128xf32>
    %c0_i32_53 = arith.constant 0 : i32
    %155 = vector.broadcast %c0_i32_53 : i32 to vector<8x128xi32>
    %156 = arith.cmpi eq, %144, %155 : vector<8x128xi32>
    %c1_i32_54 = arith.constant 1 : i32
    %157 = vector.broadcast %c1_i32_54 : i32 to vector<8x128xi32>
    %158 = arith.cmpi eq, %145, %157 : vector<8x128xi32>
    %159 = arith.andi %156, %158 : vector<8x128xi1>
    %160 = vector.shape_cast %143 : vector<1x1xf32> to vector<1x1xf32>
    %161 = vector.broadcast %160 : vector<1x1xf32> to vector<8x128xf32>
    %162 = arith.select %159, %161, %154 : vector<8x128xi1>, vector<8x128xf32>
    %c0_i32_55 = arith.constant 0 : i32
    %163 = vector.broadcast %c0_i32_55 : i32 to vector<8x128xi32>
    %164 = arith.cmpi eq, %144, %163 : vector<8x128xi32>
    %c2_i32 = arith.constant 2 : i32
    %165 = vector.broadcast %c2_i32 : i32 to vector<8x128xi32>
    %166 = arith.cmpi eq, %145, %165 : vector<8x128xi32>
    %167 = arith.andi %164, %166 : vector<8x128xi1>
    %168 = vector.shape_cast %98 : vector<1x1xf32> to vector<1x1xf32>
    %169 = vector.broadcast %168 : vector<1x1xf32> to vector<8x128xf32>
    %170 = arith.select %167, %169, %162 : vector<8x128xi1>, vector<8x128xf32>
    %c0_56 = arith.constant 0 : index
    %c0_57 = arith.constant 0 : index
    %171 = vector.load %arg2[%c0_56, %c0_57] : memref<8x128xf32, #tpu.memory_space<vmem>>, vector<8x128xf32>
    tpu.vector_store %arg2[%c0_56, %c0_57], %170 {strides = array<i32>} : memref<8x128xf32, #tpu.memory_space<vmem>>, vector<8x128xf32>,
    return
  }
}

</mosaic_0001>

<llo_original>
// kernel: tpu_custom_call.1
$region0: #{tpu_custom_call.1}
  #allocation0 [shape = 'u32[]', space=smem, size = 0x4, offset = 0x4, fixed_abs, tag = 'smem constant byte address 0x4 - core index']
  #allocation1 [shape = 'u32[72,128]{1,0:T(1,128)}', space=vmem, size = 0x9000, scoped, tag = 'internal scratch']
  %s0 = inlined_call_operand.hbm [shape: f32[16,32], index: 0, kind: input, shape index: {}]
  %s1 = inlined_call_operand.hbm [shape: f32[64,128], index: 1, kind: input, shape index: {}]
  %s2 = inlined_call_operand.hbm [shape: f32[8,128], index: 2, kind: output, shape index: {}]
  %s3 = sld [smem:[#allocation0]]
  $region26: #{tpu_custom_call.1} parent=0
    _
  %s5 = ssub.s32 1, %s3
  %s6 = scalar_select 0, %s5, %s3
  $region1: #{tpu_custom_call.1} parent=0
    #allocation2 [shape = 'u8[8192]{0}', space=vmem, size = 0x2000, scoped, tag = 'input window, operand 0, single buffered']
    #allocation3 [shape = 's32[1]{0}', space=sflag, size = 0x4, scoped, tag = 'scoped memory for tpu_custom_call.1']
    #allocation4 [shape = 's32[1]{0}', space=sflag, size = 0x4, scoped, tag = 'scoped memory for tpu_custom_call.1']
    #allocation5 [shape = 'u8[32768]{0}', space=vmem, size = 0x8000, scoped, tag = 'input window, operand 1, single buffered']
    #allocation6 [shape = 's32[1]{0}', space=sflag, size = 0x4, scoped, tag = 'scoped memory for tpu_custom_call.1']
    #allocation7 [shape = 'u8[4096]{0}', space=vmem, size = 0x1000, scoped, tag = 'output window, operand 0, single buffered']
    %7 = vsyncpa [#allocation3], 0
    %8 = vsyncpa [#allocation6], 0
    %9 = vsyncpa [#allocation4], 0
    // Predicated region
    $region2: #{tpu_custom_call.1} parent=1 // pred_check
      _
    $region3: #{tpu_custom_call.1} parent=1 // pred_check_branch
      %11 = sbr.rel (0) target = $region5
    $region4: #{tpu_custom_call.1} parent=1 // pred_region
      %13 = vsyncadd [#allocation3], 0
      %s14 = sshll.u32 %s0, 4
      %s15 = int_to_ptr.hbm [resolvable:$true] %s14
      %s16 = sshll.u32 [#allocation2], 4
      %s17 = int_to_ptr.vmem [resolvable:$true] %s16
      %22 = dma.hbm_to_vmem [thread:$0]  %s15, 256, %s17, [#allocation3], 128, 128, 8
    $region5: #{tpu_custom_call.1} parent=1 // pred_fallthru
      _
    // Predicated region
    $region6: #{tpu_custom_call.1} parent=1 // pred_check
      _
    $region7: #{tpu_custom_call.1} parent=1 // pred_check_branch
      %24 = sbr.rel (0) target = $region9
    $region8: #{tpu_custom_call.1} parent=1 // pred_region
      %26 = vsyncadd [#allocation6], 0
      %s27 = sshll.u32 %s1, 4
      %s28 = int_to_ptr.hbm [resolvable:$true] %s27
      %s29 = sshll.u32 [#allocation5], 4
      %s30 = int_to_ptr.vmem [resolvable:$true] %s29
      %35 = dma.hbm_to_vmem [thread:$0]  %s28, 1024, %s30, [#allocation6], 128, 128, 8
    $region9: #{tpu_custom_call.1} parent=1 // pred_fallthru
      _
    // Predicated region
    $region10: #{tpu_custom_call.1} parent=1 // pred_check
      _
    $region11: #{tpu_custom_call.1} parent=1 // pred_check_branch
      %37 = sbr.rel (0) target = $region13
    $region12: #{tpu_custom_call.1} parent=1 // pred_region
      %39 = dma.done [#allocation3], 256
    $region13: #{tpu_custom_call.1} parent=1 // pred_fallthru
      _
    // Predicated region
    $region14: #{tpu_custom_call.1} parent=1 // pred_check
      _
    $region15: #{tpu_custom_call.1} parent=1 // pred_check_branch
      %41 = sbr.rel (0) target = $region17
    $region16: #{tpu_custom_call.1} parent=1 // pred_region
      %43 = dma.done [#allocation6], 1024
    $region17: #{tpu_custom_call.1} parent=1 // pred_fallthru
      _
    %v44 = vld [vmem:[#allocation2] sm:$0xff]
    %v45 = vld [vmem:[#allocation2 + $0x8] sm:$0xff]
    %v46 = vlaneseq
    %v47 = vshrl.u32 %v46, 7
    %v48 = vadd.s32 %v47, 8
    %v49 = vand.u32 %v47, 7
    %v50 = vand.u32 %v48, 7
    %vm51 = vcmp.eq.s32.totalorder %v49, 0
    %vm52 = vcmp.eq.s32.totalorder %v50, 0
    %v53 = vrot.slane %v44, 7
    %v54 = vrot.slane %v45, 7
    %vm55 = vcmp.lt.s32.totalorder %v47, 1
    %v56 = vsel %vm55, %v53, %v54
    %v57 = vsel %vm55, %v54, %v53
    %v58 = vsel %vm51, 0.0, %v57
    %v59 = vsel %vm52, 0.0, %v56
    %vm60 = vcmp.eq.s32.totalorder %v49, 7
    %vm61 = vcmp.eq.s32.totalorder %v50, 7
    %v62 = vrot.slane %v44, 1
    %v63 = vrot.slane %v45, 1
    %vm64 = vcmp.lt.s32.totalorder %v47, 7
    %v65 = vsel %vm64, %v62, %v63
    %v66 = vsel %vm64, %v63, %v62
    %v67 = vsel %vm60, 0.0, %v65
    %v68 = vsel %vm61, 0.0, %v66
    %v69 = vld [vmem:[#allocation5] sm:$0xff]
    %v70 = vld [vmem:[#allocation5 + $0x8] sm:$0xff]
    %v71 = vld [vmem:[#allocation5 + $0x10] sm:$0xff]
    %v72 = vld [vmem:[#allocation5 + $0x18] sm:$0xff]
    %77 = vrot.lane.b32.xlu0 %v69, 96
    %v78 = vpop.permute.xlu0 %77
    %79 = vrot.lane.b32.xlu0 %v70, 96
    %v80 = vpop.permute.xlu0 %79
    %81 = vrot.lane.b32.xlu0 %v71, 96
    %v82 = vpop.permute.xlu0 %81
    %83 = vrot.lane.b32.xlu0 %v72, 96
    %v84 = vpop.permute.xlu0 %83
    %vm89 = vcmask 261120
    %v91 = vsel %vm89, %v44, 0
    %v94 = vsel %vm89, %v45, 0
    %96 = vmatpush.msra.mxu0 0.0
    %97 = vmatpush.msra.mxu0 0.0
    %98 = vmatpush.msra.mxu0 0.0
    %99 = vmatpush.msra.mxu0 0.0
    %100 = vmatpush.msra.mxu0 0.0
    %101 = vmatpush.msra.mxu0 0.0
    %102 = vmatpush.msra.mxu0 0.0
    %103 = vmatpush.msra.mxu0 0.0
    %104 = vmatpush.msra.mxu0 0.0
    %105 = vmatpush.msra.mxu0 0.0
    %106 = vmatpush.msra.mxu0 0.0
    %107 = vmatpush.msra.mxu0 0.0
    %108 = vmatpush.msra.mxu0 %v84
    %109 = vmatpush.msra.mxu0 %v82
    %110 = vmatpush.msra.mxu0 %v80
    %111 = vmatpush.msra.mxu0 %v78
    %112 = vmatmul.f32.gmra.mxu0 %v91
    %v113 = vpop.f32.mrf.mxu0
    %v114 = vadd.f32 0.0, %v113
    %115 = vmatmul.f32.gmra.mxu0 %v94
    %v116 = vpop.f32.mrf.mxu0
    %v117 = vadd.f32 0.0, %v116
    %118 = vdwg.mxu0
    %v120 = vsel %vm89, %v58, 0
    %v123 = vsel %vm89, %v59, 0
    %125 = vmatpush.msra.mxu0 0.0
    %126 = vmatpush.msra.mxu0 0.0
    %127 = vmatpush.msra.mxu0 0.0
    %128 = vmatpush.msra.mxu0 0.0
    %129 = vmatpush.msra.mxu0 0.0
    %130 = vmatpush.msra.mxu0 0.0
    %131 = vmatpush.msra.mxu0 0.0
    %132 = vmatpush.msra.mxu0 0.0
    %133 = vmatpush.msra.mxu0 0.0
    %134 = vmatpush.msra.mxu0 0.0
    %135 = vmatpush.msra.mxu0 0.0
    %136 = vmatpush.msra.mxu0 0.0
    %137 = vmatpush.msra.mxu0 %v72
    %138 = vmatpush.msra.mxu0 %v71
    %139 = vmatpush.msra.mxu0 %v70
    %140 = vmatpush.msra.mxu0 %v69
    %141 = vmatmul.f32.gmra.mxu0 %v120
    %v142 = vpop.f32.mrf.mxu0
    %v143 = vadd.f32 %v114, %v142
    %144 = vmatmul.f32.gmra.mxu0 %v123
    %v145 = vpop.f32.mrf.mxu0
    %v146 = vadd.f32 %v117, %v145
    %147 = vdwg.mxu0
    %148 = vrot.lane.b32.xlu0 %v69, 64
    %v149 = vpop.permute.xlu0 %148
    %150 = vrot.lane.b32.xlu0 %v70, 64
    %v151 = vpop.permute.xlu0 %150
    %152 = vrot.lane.b32.xlu0 %v71, 64
    %v153 = vpop.permute.xlu0 %152
    %154 = vrot.lane.b32.xlu0 %v72, 64
    %v155 = vpop.permute.xlu0 %154
    %v161 = vsel %vm89, %v67, 0
    %v164 = vsel %vm89, %v68, 0
    %166 = vmatpush.msra.mxu0 0.0
    %167 = vmatpush.msra.mxu0 0.0
    %168 = vmatpush.msra.mxu0 0.0
    %169 = vmatpush.msra.mxu0 0.0
    %170 = vmatpush.msra.mxu0 0.0
    %171 = vmatpush.msra.mxu0 0.0
    %172 = vmatpush.msra.mxu0 0.0
    %173 = vmatpush.msra.mxu0 0.0
    %174 = vmatpush.msra.mxu0 0.0
    %175 = vmatpush.msra.mxu0 0.0
    %176 = vmatpush.msra.mxu0 0.0
    %177 = vmatpush.msra.mxu0 0.0
    %178 = vmatpush.msra.mxu0 %v155
    %179 = vmatpush.msra.mxu0 %v153
    %180 = vmatpush.msra.mxu0 %v151
    %181 = vmatpush.msra.mxu0 %v149
    %182 = vmatmul.f32.gmra.mxu0 %v161
    %v183 = vpop.f32.mrf.mxu0
    %v184 = vadd.f32 0.0, %v183
    %185 = vmatmul.f32.gmra.mxu0 %v164
    %v186 = vpop.f32.mrf.mxu0
    %v187 = vadd.f32 0.0, %v186
    %188 = vdwg.mxu0
    %v189 = vadd.f32 %v143, %v184
    %v190 = vadd.f32 %v146, %v187
    %v191 = vld [vmem:[#allocation5 + $0x20] sm:$0x1]
    %v192 = vperm.slane %v191, 0
    %194 = vrot.lane.b32.xlu0 %v192, 32
    %v195 = vpop.permute.xlu0 %194
    %v197 = vadd.f32 %v189, %v195
    %v198 = vadd.f32 %v190, %v195
    %v199 = vand.u32 2147483647, %v197
    %v200 = vand.u32 2147483647, %v198
    %v201 = vsub.f32 0.0, %v199
    %v202 = vsub.f32 0.0, %v200
    %v203 = vmul.f32 %v201, 1.442695
    %v204 = vpow.pop %v203
    %v205 = vmul.f32 %v202, 1.442695
    %v206 = vpow.pop %v205
    %v207 = vadd.f32 %v204, 1.0
    %v208 = vadd.f32 %v206, 1.0
    %v209 = vrcp.pop %v207
    %v210 = vmul.f32 %v207, %v209
    %v211 = vsub.f32 1.0, %v210
    %v212 = vmul.f32 %v209, %v211
    %v213 = vadd.f32 %v209, %v212
    %vm214 = vweird.f32 %v207
    %vm215 = vweird.f32 %v209
    %vm216 = vmor %vm214, %vm215
    %v217 = vsel %vm216, %v209, %v213
    %v218 = vand.u32 2147483647, %v207
    %vm219 = vcmp.eq.f32.partialorder %v218, 8.507059e+37
    %v220 = vand.u32 %v207, 2147483648
    %v221 = vor.u32 1.1754944e-38, %v220
    %v222 = vsel %vm219, %v221, %v217
    %v223 = vmul.f32 1.0, %v222
    %v224 = vrcp.pop %v208
    %v225 = vmul.f32 %v208, %v224
    %v226 = vsub.f32 1.0, %v225
    %v227 = vmul.f32 %v224, %v226
    %v228 = vadd.f32 %v224, %v227
    %vm229 = vweird.f32 %v208
    %vm230 = vweird.f32 %v224
    %vm231 = vmor %vm229, %vm230
    %v232 = vsel %vm231, %v224, %v228
    %v233 = vand.u32 2147483647, %v208
    %vm234 = vcmp.eq.f32.partialorder %v233, 8.507059e+37
    %v235 = vand.u32 %v208, 2147483648
    %v236 = vor.u32 1.1754944e-38, %v235
    %v237 = vsel %vm234, %v236, %v232
    %v238 = vmul.f32 1.0, %v237
    %vm239 = vcmp.ge.f32.partialorder %v197, 0.0
    %vm240 = vcmp.ge.f32.partialorder %v198, 0.0
    %v241 = vsub.f32 1.0, %v223
    %v242 = vsub.f32 1.0, %v238
    %v243 = vsel %vm239, %v223, %v241
    %v244 = vsel %vm240, %v238, %v242
    %v245 = vmul.f32 %v44, %v243
    %v246 = vmul.f32 %v45, %v244
    %v247 = vld [vmem:[#allocation5 + $0x20] sm:$0xff]
    %v248 = vld [vmem:[#allocation5 + $0x28] sm:$0xff]
    %v249 = vld [vmem:[#allocation5 + $0x30] sm:$0xff]
    %v250 = vld [vmem:[#allocation5 + $0x38] sm:$0xff]
    %255 = vrot.lane.b32.xlu0 %v247, 80
    %v256 = vpop.permute.xlu0 %255
    %257 = vrot.lane.b32.xlu0 %v248, 80
    %v258 = vpop.permute.xlu0 %257
    %259 = vrot.lane.b32.xlu0 %v249, 80
    %v260 = vpop.permute.xlu0 %259
    %261 = vrot.lane.b32.xlu0 %v250, 80
    %v262 = vpop.permute.xlu0 %261
    %vm263 = vcmask 130048
    %v264 = vsel %vm263, %v256, 0
    %v266 = vsel %vm263, %v258, 0
    %v268 = vsel %vm263, %v260, 0
    %v270 = vsel %vm263, %v262, 0
    %272 = vmatpush.msra.mxu0 0.0
    %273 = vmatpush.msra.mxu0 0.0
    %274 = vmatpush.msra.mxu0 0.0
    %275 = vmatpush.msra.mxu0 0.0
    %276 = vmatpush.msra.mxu0 0.0
    %277 = vmatpush.msra.mxu0 0.0
    %278 = vmatpush.msra.mxu0 0.0
    %279 = vmatpush.msra.mxu0 0.0
    %280 = vmatpush.msra.mxu0 0.0
    %281 = vmatpush.msra.mxu0 0.0
    %282 = vmatpush.msra.mxu0 0.0
    %283 = vmatpush.msra.mxu0 0.0
    %284 = vmatpush.msra.mxu0 0.0
    %285 = vmatpush.msra.mxu0 0.0
    %286 = vmatpush.msra.mxu0 %v246
    %287 = vmatpush.msra.mxu0 %v245
    %288 = vmatmul.f32.gmra.mxu0 %v264
    %v289 = vpop.f32.mrf.mxu0
    %v290 = vadd.f32 0.0, %v289
    %291 = vmatmul.f32.gmra.mxu0 %v266
    %v292 = vpop.f32.mrf.mxu0
    %v293 = vadd.f32 0.0, %v292
    %294 = vmatmul.f32.gmra.mxu0 %v268
    %v295 = vpop.f32.mrf.mxu0
    %v296 = vadd.f32 0.0, %v295
    %297 = vmatmul.f32.gmra.mxu0 %v270
    %v298 = vpop.f32.mrf.mxu0
    %v299 = vadd.f32 0.0, %v298
    %300 = vdwg.mxu0
    %v302 = vsel %vm89, %v290, 0
    %v305 = vsel %vm89, %v293, 0
    %v308 = vsel %vm89, %v296, 0
    %v311 = vsel %vm89, %v299, 0
    %313 = vmatpush.msra.mxu0 0.0
    %314 = vmatpush.msra.mxu0 0.0
    %315 = vmatpush.msra.mxu0 0.0
    %316 = vmatpush.msra.mxu0 0.0
    %317 = vmatpush.msra.mxu0 0.0
    %318 = vmatpush.msra.mxu0 0.0
    %319 = vmatpush.msra.mxu0 0.0
    %320 = vmatpush.msra.mxu0 0.0
    %321 = vmatpush.msra.mxu0 0.0
    %322 = vmatpush.msra.mxu0 0.0
    %323 = vmatpush.msra.mxu0 0.0
    %324 = vmatpush.msra.mxu0 0.0
    %325 = vmatpush.msra.mxu0 %v250
    %326 = vmatpush.msra.mxu0 %v249
    %327 = vmatpush.msra.mxu0 %v248
    %328 = vmatpush.msra.mxu0 %v247
    %329 = vmatmul.f32.gmra.mxu0 %v302
    %v330 = vpop.f32.mrf.mxu0
    %v331 = vadd.f32 0.0, %v330
    %332 = vmatmul.f32.gmra.mxu0 %v305
    %v333 = vpop.f32.mrf.mxu0
    %v334 = vadd.f32 0.0, %v333
    %335 = vmatmul.f32.gmra.mxu0 %v308
    %v336 = vpop.f32.mrf.mxu0
    %v337 = vadd.f32 0.0, %v336
    %338 = vmatmul.f32.gmra.mxu0 %v311
    %v339 = vpop.f32.mrf.mxu0
    %v340 = vadd.f32 0.0, %v339
    %341 = vdwg.mxu0
    %342 = vrot.lane.b32.xlu0 %v69, 32
    %v343 = vpop.permute.xlu0 %342
    %344 = vrot.lane.b32.xlu0 %v70, 32
    %v345 = vpop.permute.xlu0 %344
    %346 = vrot.lane.b32.xlu0 %v71, 32
    %v347 = vpop.permute.xlu0 %346
    %348 = vrot.lane.b32.xlu0 %v72, 32
    %v349 = vpop.permute.xlu0 %348
    %v350 = vsel %vm89, %v343, 0
    %v352 = vsel %vm89, %v345, 0
    %v354 = vsel %vm89, %v347, 0
    %v356 = vsel %vm89, %v349, 0
    %358 = vmatpush.msra.mxu0 0.0
    %359 = vmatpush.msra.mxu0 0.0
    %360 = vmatpush.msra.mxu0 0.0
    %361 = vmatpush.msra.mxu0 0.0
    %362 = vmatpush.msra.mxu0 0.0
    %363 = vmatpush.msra.mxu0 0.0
    %364 = vmatpush.msra.mxu0 0.0
    %365 = vmatpush.msra.mxu0 0.0
    %366 = vmatpush.msra.mxu0 0.0
    %367 = vmatpush.msra.mxu0 0.0
    %368 = vmatpush.msra.mxu0 0.0
    %369 = vmatpush.msra.mxu0 0.0
    %370 = vmatpush.msra.mxu0 %v340
    %371 = vmatpush.msra.mxu0 %v337
    %372 = vmatpush.msra.mxu0 %v334
    %373 = vmatpush.msra.mxu0 %v331
    %374 = vmatmul.f32.gmra.mxu0 %v350
    %v375 = vpop.f32.mrf.mxu0
    %v376 = vadd.f32 0.0, %v375
    %377 = vmatmul.f32.gmra.mxu0 %v352
    %v378 = vpop.f32.mrf.mxu0
    %v379 = vadd.f32 0.0, %v378
    %380 = vmatmul.f32.gmra.mxu0 %v354
    %v381 = vpop.f32.mrf.mxu0
    %v382 = vadd.f32 0.0, %v381
    %383 = vmatmul.f32.gmra.mxu0 %v356
    %v384 = vpop.f32.mrf.mxu0
    %v385 = vadd.f32 0.0, %v384
    %386 = vdwg.mxu0
    %v387 = vmul.f32 %v44, %v376
    %v388 = vmul.f32 %v45, %v379
    %389 = vrot.lane.b32.xlu0 %v247, 88
    %v390 = vpop.permute.xlu0 %389
    %391 = vrot.lane.b32.xlu0 %v248, 88
    %v392 = vpop.permute.xlu0 %391
    %393 = vrot.lane.b32.xlu0 %v249, 88
    %v394 = vpop.permute.xlu0 %393
    %395 = vrot.lane.b32.xlu0 %v250, 88
    %v396 = vpop.permute.xlu0 %395
    %v402 = vsel %vm89, %v387, 0
    %v405 = vsel %vm89, %v388, 0
    %407 = vmatpush.msra.mxu0 0.0
    %408 = vmatpush.msra.mxu0 0.0
    %409 = vmatpush.msra.mxu0 0.0
    %410 = vmatpush.msra.mxu0 0.0
    %411 = vmatpush.msra.mxu0 0.0
    %412 = vmatpush.msra.mxu0 0.0
    %413 = vmatpush.msra.mxu0 0.0
    %414 = vmatpush.msra.mxu0 0.0
    %415 = vmatpush.msra.mxu0 0.0
    %416 = vmatpush.msra.mxu0 0.0
    %417 = vmatpush.msra.mxu0 0.0
    %418 = vmatpush.msra.mxu0 0.0
    %419 = vmatpush.msra.mxu0 %v396
    %420 = vmatpush.msra.mxu0 %v394
    %421 = vmatpush.msra.mxu0 %v392
    %422 = vmatpush.msra.mxu0 %v390
    %423 = vmatmul.f32.gmra.mxu0 %v402
    %v424 = vpop.f32.mrf.mxu0
    %v425 = vadd.f32 0.0, %v424
    %426 = vmatmul.f32.gmra.mxu0 %v405
    %v427 = vpop.f32.mrf.mxu0
    %v428 = vadd.f32 0.0, %v427
    %429 = vdwg.mxu0
    %v430 = vmul.f32 %v44, %v382
    %v431 = vmul.f32 %v45, %v385
    %v433 = vsel %vm89, %v430, 0
    %v436 = vsel %vm89, %v431, 0
    %438 = vmatpush.msra.mxu0 0.0
    %439 = vmatpush.msra.mxu0 0.0
    %440 = vmatpush.msra.mxu0 0.0
    %441 = vmatpush.msra.mxu0 0.0
    %442 = vmatpush.msra.mxu0 0.0
    %443 = vmatpush.msra.mxu0 0.0
    %444 = vmatpush.msra.mxu0 0.0
    %445 = vmatpush.msra.mxu0 0.0
    %446 = vmatpush.msra.mxu0 0.0
    %447 = vmatpush.msra.mxu0 0.0
    %448 = vmatpush.msra.mxu0 0.0
    %449 = vmatpush.msra.mxu0 0.0
    %450 = vmatpush.msra.mxu0 %v396
    %451 = vmatpush.msra.mxu0 %v394
    %452 = vmatpush.msra.mxu0 %v392
    %453 = vmatpush.msra.mxu0 %v390
    %454 = vmatmul.f32.gmra.mxu0 %v433
    %v455 = vpop.f32.mrf.mxu0
    %v456 = vadd.f32 0.0, %v455
    %457 = vmatmul.f32.gmra.mxu0 %v436
    %v458 = vpop.f32.mrf.mxu0
    %v459 = vadd.f32 0.0, %v458
    %460 = vdwg.mxu0
    %v461 = vand.u32 2147483647, %v425
    %v462 = vand.u32 2147483647, %v428
    %v463 = vsub.f32 0.0, %v461
    %v464 = vsub.f32 0.0, %v462
    %v465 = vmul.f32 %v463, 1.442695
    %v466 = vpow.pop %v465
    %v467 = vmul.f32 %v464, 1.442695
    %v468 = vpow.pop %v467
    %v469 = vadd.f32 %v466, 1.0
    %v470 = vadd.f32 %v468, 1.0
    %v471 = vrcp.pop %v469
    %v472 = vmul.f32 %v469, %v471
    %v473 = vsub.f32 1.0, %v472
    %v474 = vmul.f32 %v471, %v473
    %v475 = vadd.f32 %v471, %v474
    %vm476 = vweird.f32 %v469
    %vm477 = vweird.f32 %v471
    %vm478 = vmor %vm476, %vm477
    %v479 = vsel %vm478, %v471, %v475
    %v480 = vand.u32 2147483647, %v469
    %vm481 = vcmp.eq.f32.partialorder %v480, 8.507059e+37
    %v482 = vand.u32 %v469, 2147483648
    %v483 = vor.u32 1.1754944e-38, %v482
    %v484 = vsel %vm481, %v483, %v479
    %v485 = vmul.f32 1.0, %v484
    %v486 = vrcp.pop %v470
    %v487 = vmul.f32 %v470, %v486
    %v488 = vsub.f32 1.0, %v487
    %v489 = vmul.f32 %v486, %v488
    %v490 = vadd.f32 %v486, %v489
    %vm491 = vweird.f32 %v470
    %vm492 = vweird.f32 %v486
    %vm493 = vmor %vm491, %vm492
    %v494 = vsel %vm493, %v486, %v490
    %v495 = vand.u32 2147483647, %v470
    %vm496 = vcmp.eq.f32.partialorder %v495, 8.507059e+37
    %v497 = vand.u32 %v470, 2147483648
    %v498 = vor.u32 1.1754944e-38, %v497
    %v499 = vsel %vm496, %v498, %v494
    %v500 = vmul.f32 1.0, %v499
    %vm501 = vcmp.ge.f32.partialorder %v425, 0.0
    %vm502 = vcmp.ge.f32.partialorder %v428, 0.0
    %v503 = vsub.f32 1.0, %v485
    %v504 = vsub.f32 1.0, %v500
    %v505 = vsel %vm501, %v485, %v503
    %v506 = vsel %vm502, %v500, %v504
    %vm507 = vcmp.gt.f32.partialorder %v456, 20.0
    %vm508 = vcmp.gt.f32.partialorder %v459, 20.0
    %v509 = vmin.f32 %v456, 20.0
    %v510 = vmin.f32 %v459, 20.0
    %v511 = vmul.f32 %v509, 1.442695
    %v512 = vpow.pop %v511
    %v513 = vmul.f32 %v510, 1.442695
    %v514 = vpow.pop %v513
    %v515 = vadd.f32 %v512, 1.0
    %v516 = vadd.f32 %v514, 1.0
    %v517 = vlog2.pop %v515
    %v518 = vmul.f32 %v517, 0.6931472
    %v519 = vlog2.pop %v516
    %v520 = vmul.f32 %v519, 0.6931472
    %v521 = vsel %vm507, %v456, %v518
    %v522 = vsel %vm508, %v459, %v520
    %v523 = vmax.f32 %v521, 1e-06
    %v524 = vmax.f32 %v522, 1e-06
    %v525 = vlog2.pop %v523
    %v526 = vmul.f32 %v525, 0.6931472
    %v527 = vlog2.pop %v524
    %v528 = vmul.f32 %v527, 0.6931472
    %v529 = vsub.f32 %v523, %v526
    %v530 = vsub.f32 %v524, %v528
    %v531 = vsub.f32 %v529, 1.0
    %v532 = vsub.f32 %v530, 1.0
    %v533 = vmul.f32 %v505, %v505
    %v534 = vmul.f32 %v506, %v506
    %v535 = vadd.f32 %v531, %v533
    %v536 = vadd.f32 %v532, %v534
    %v537 = vmul.f32 %v535, 0.5
    %v538 = vmul.f32 %v536, 0.5
    %vm539 = vcmask 31744
    %v540 = vsel %vm539, %v537, 0.0
    %v541 = vsel %vm539, %v538, 0.0
    %v542 = vadd.f32 %v540, %v541
    %543 = vadd.xlane.f32.xlu0 %v542
    %v544 = vpop.xlane.xlu0 %543
    %v545 = vrot.slane %v544, 4
    %v546 = vadd.f32 %v544, %v545
    %v547 = vrot.slane %v546, 2
    %v548 = vadd.f32 %v546, %v547
    %v549 = vrot.slane %v548, 1
    %v550 = vadd.f32 %v548, %v549
    %s551 = vtos %v550
    %v552 = vstv %s551
    %v553 = vmul.f32 %v552, 0.015625
    %v554 = vadd.s32 %v47, 16
    %v555 = vadd.s32 %v47, 24
    %vm556 = vcmp.lt.s32.totalorder %v47, 16
    %vm557 = vcmp.lt.s32.totalorder %v48, 16
    %vm558 = vcmp.lt.s32.totalorder %v554, 16
    %vm559 = vcmp.lt.s32.totalorder %v555, 16
    %v560 = vperm.slane %v505, 0
    %v561 = vperm.slane %v506, 0
    %v562 = vsel %vm556, %v560, %v561
    %v563 = vsel %vm557, %v560, %v561
    %v564 = vsel %vm558, %v560, %v561
    %v565 = vsel %vm559, %v560, %v561
    %v566 = vperm.slane %v523, 0
    %v567 = vperm.slane %v524, 0
    %v568 = vsel %vm556, %v566, %v567
    %v569 = vsel %vm557, %v566, %v567
    %v570 = vsel %vm558, %v566, %v567
    %v571 = vsel %vm559, %v566, %v567
    %572 = vset.pattern.permute.xlu0 65
    %573 = vperm.xlu0 %572, %v247
    %v574 = vpop.permute.xlu0 %573
    %576 = vset.pattern.permute.xlu0 65
    %577 = vperm.xlu0 %576, %v248
    %v578 = vpop.permute.xlu0 %577
    %580 = vset.pattern.permute.xlu0 65
    %581 = vperm.xlu0 %580, %v249
    %v582 = vpop.permute.xlu0 %581
    %584 = vset.pattern.permute.xlu0 65
    %585 = vperm.xlu0 %584, %v250
    %v586 = vpop.permute.xlu0 %585
    %v588 = vadd.f32 %v574, %v568
    %v589 = vadd.f32 %v578, %v569
    %v590 = vadd.f32 %v582, %v570
    %v591 = vadd.f32 %v586, %v571
    %v592 = vrsqrt.pop %v588
    %v593 = vmul.f32 %v592, %v588
    %v594 = vmul.f32 %v593, %v592
    %v595 = vmul.f32 0.5, %v594
    %v596 = vsub.f32 1.5, %v595
    %v597 = vmul.f32 %v592, %v596
    %vm598 = vweird.f32 %v588
    %vm599 = vweird.f32 %v592
    %vm600 = vmor %vm598, %vm599
    %v601 = vsel %vm600, %v592, %v597
    %v602 = vrsqrt.pop %v589
    %v603 = vmul.f32 %v602, %v589
    %v604 = vmul.f32 %v603, %v602
    %v605 = vmul.f32 0.5, %v604
    %v606 = vsub.f32 1.5, %v605
    %v607 = vmul.f32 %v602, %v606
    %vm608 = vweird.f32 %v589
    %vm609 = vweird.f32 %v602
    %vm610 = vmor %vm608, %vm609
    %v611 = vsel %vm610, %v602, %v607
    %v612 = vrsqrt.pop %v590
    %v613 = vmul.f32 %v612, %v590
    %v614 = vmul.f32 %v613, %v612
    %v615 = vmul.f32 0.5, %v614
    %v616 = vsub.f32 1.5, %v615
    %v617 = vmul.f32 %v612, %v616
    %vm618 = vweird.f32 %v590
    %vm619 = vweird.f32 %v612
    %vm620 = vmor %vm618, %vm619
    %v621 = vsel %vm620, %v612, %v617
    %v622 = vrsqrt.pop %v591
    %v623 = vmul.f32 %v622, %v591
    %v624 = vmul.f32 %v623, %v622
    %v625 = vmul.f32 0.5, %v624
    %v626 = vsub.f32 1.5, %v625
    %v627 = vmul.f32 %v622, %v626
    %vm628 = vweird.f32 %v591
    %vm629 = vweird.f32 %v622
    %vm630 = vmor %vm628, %vm629
    %v631 = vsel %vm630, %v622, %v627
    %632 = vset.pattern.permute.xlu0 64
    %633 = vperm.xlu0 %632, %v247
    %v634 = vpop.permute.xlu0 %633
    %636 = vset.pattern.permute.xlu0 64
    %637 = vperm.xlu0 %636, %v248
    %v638 = vpop.permute.xlu0 %637
    %640 = vset.pattern.permute.xlu0 64
    %641 = vperm.xlu0 %640, %v249
    %v642 = vpop.permute.xlu0 %641
    %644 = vset.pattern.permute.xlu0 64
    %645 = vperm.xlu0 %644, %v250
    %v646 = vpop.permute.xlu0 %645
    %v648 = vsub.f32 %v562, %v634
    %v649 = vsub.f32 %v563, %v638
    %v650 = vsub.f32 %v564, %v642
    %v651 = vsub.f32 %v565, %v646
    %v652 = vmul.f32 %v648, %v601
    %v653 = vmul.f32 %v649, %v611
    %v654 = vmul.f32 %v650, %v621
    %v655 = vmul.f32 %v651, %v631
    %v656 = vmul.f32 %v652, -0.5
    %v657 = vmul.f32 %v653, -0.5
    %v658 = vmul.f32 %v654, -0.5
    %v659 = vmul.f32 %v655, -0.5
    %v660 = vmul.f32 %v656, %v652
    %v661 = vmul.f32 %v657, %v653
    %v662 = vmul.f32 %v658, %v654
    %v663 = vmul.f32 %v659, %v655
    %v664 = vmul.f32 %v660, 1.442695
    %v665 = vpow.pop %v664
    %v666 = vmul.f32 %v661, 1.442695
    %v667 = vpow.pop %v666
    %v668 = vmul.f32 %v662, 1.442695
    %v669 = vpow.pop %v668
    %v670 = vmul.f32 %v663, 1.442695
    %v671 = vpow.pop %v670
    %v672 = vmul.f32 %v665, 0.3989423
    %v673 = vmul.f32 %v667, 0.3989423
    %v674 = vmul.f32 %v669, 0.3989423
    %v675 = vmul.f32 %v671, 0.3989423
    %v676 = vmul.f32 %v672, %v601
    %v677 = vmul.f32 %v673, %v611
    %v678 = vmul.f32 %v674, %v621
    %v679 = vmul.f32 %v675, %v631
    %684 = vrot.lane.b32.xlu0 %v331, 96
    %v685 = vpop.permute.xlu0 %684
    %686 = vrot.lane.b32.xlu0 %v334, 96
    %v687 = vpop.permute.xlu0 %686
    %688 = vrot.lane.b32.xlu0 %v337, 96
    %v689 = vpop.permute.xlu0 %688
    %690 = vrot.lane.b32.xlu0 %v340, 96
    %v691 = vpop.permute.xlu0 %690
    %v696 = vmul.f32 %v676, %v685
    %v697 = vmul.f32 %v677, %v687
    %v698 = vmul.f32 %v678, %v689
    %v699 = vmul.f32 %v679, %v691
    %v700 = vsel %vm539, %v696, 0.0
    %v701 = vsel %vm539, %v697, 0.0
    %v702 = vadd.f32 %v700, %v701
    %703 = vadd.xlane.f32.xlu0 %v702
    %v704 = vpop.xlane.xlu0 %703
    %v705 = vrot.slane %v704, 4
    %v706 = vadd.f32 %v704, %v705
    %v707 = vrot.slane %v706, 2
    %v708 = vadd.f32 %v706, %v707
    %v709 = vrot.slane %v708, 1
    %v710 = vadd.f32 %v708, %v709
    %s711 = vtos %v710
    %v712 = vsel %vm539, %v698, 0.0
    %v713 = vsel %vm539, %v699, 0.0
    %v714 = vadd.f32 %v712, %v713
    %715 = vadd.xlane.f32.xlu0 %v714
    %v716 = vpop.xlane.xlu0 %715
    %v717 = vrot.slane %v716, 4
    %v718 = vadd.f32 %v716, %v717
    %v719 = vrot.slane %v718, 2
    %v720 = vadd.f32 %v718, %v719
    %v721 = vrot.slane %v720, 1
    %v722 = vadd.f32 %v720, %v721
    %s723 = vtos %v722
    %v724 = vlaneseq
    %v725 = vand.u32 %v724, 127
    %vm726 = vcmp.eq.s32.totalorder %v47, 0
    %vm727 = vcmp.eq.s32.totalorder %v725, 0
    %vm728 = vmand %vm726, %vm727
    %v729 = vstv %s711
    %v730 = vsel %vm728, %v729, 0.0
    %vm731 = vcmp.eq.s32.totalorder %v725, 1
    %vm732 = vmand %vm726, %vm731
    %v733 = vstv %s723
    %v734 = vsel %vm732, %v733, %v730
    %vm735 = vcmp.eq.s32.totalorder %v725, 2
    %vm736 = vmand %vm726, %vm735
    %v737 = vsel %vm736, %v553, %v734
    %738 = vst [vmem:[#allocation7] sm:$0xff] %v737
    // Predicated region
    $region18: #{tpu_custom_call.1} parent=1 // pred_check
      _
    $region19: #{tpu_custom_call.1} parent=1 // pred_check_branch
      %740 = sbr.rel (0) target = $region21
    $region20: #{tpu_custom_call.1} parent=1 // pred_region
      %742 = vsyncadd [#allocation4], 0
      %s744 = sshll.u32 [#allocation7], 4
      %s745 = int_to_ptr.vmem [resolvable:$true] %s744
      %s746 = sshll.u32 %s2, 4
      %s747 = int_to_ptr.hbm [resolvable:$true] %s746
      %749 = dma.vmem_to_hbm [thread:$0]  %s745, 128, %s747, [#allocation4]
    $region21: #{tpu_custom_call.1} parent=1 // pred_fallthru
      _
    // Predicated region
    $region22: #{tpu_custom_call.1} parent=1 // pred_check
      _
    $region23: #{tpu_custom_call.1} parent=1 // pred_check_branch
      %751 = sbr.rel (0) target = $region25
    $region24: #{tpu_custom_call.1} parent=1 // pred_region
      %753 = dma.done [#allocation4], 128
    $region25: #{tpu_custom_call.1} parent=1 // pred_fallthru
      _
    %754 = vsyncpa [#allocation3], 1
    %755 = vsyncpa [#allocation6], 1
    %756 = vsyncpa [#allocation4], 1

</llo_original>
